<compile_context>
chip_gen: v7x
topology: tpu7x:2x2x1
jax: 0.10.0
libtpu: 0.0.40
codegen_flags: <defaults>
</compile_context>

<pallas_src>
import functools

import jax
import jax.numpy as jnp
from jax.experimental import pallas as pl
from jax.experimental.pallas import tpu as pltpu


def _round_up(x, m):
    return ((x + m - 1) // m) * m


def _value_head_kernel(x_ref, w_ref, b_ref, o_ref, acc_ref, *, tile_h, nk, h_total):
    # x_ref  : (TILE_B, TILE_H) VMEM activation tile (last blocks may be ragged:
    #          out-of-bounds rows/cols hold unspecified data).
    # w_ref  : (1, nk*TILE_H)   VMEM full weight row, resident across grid steps.
    # b_ref  : (1, 1)           SMEM bias scalar (f32).
    # o_ref  : (1, 1, TILE_B)   VMEM lane-dense output row for this batch tile.
    # acc_ref: (TILE_B, 128)    VMEM f32 lane-wise partial sums.
    k = pl.program_id(1)

    n_chunks = tile_h // 128                  # 128-lane chunks per full hidden block
    w_last = h_total - (nk - 1) * tile_h      # valid width of the last hidden block
    full_last = w_last // 128                 # fully valid chunks in the last block
    rem = w_last - full_last * 128            # width of the trailing partial chunk

    def chunk_prod(c, mask_width=None):
        # One (TILE_B, 128) activation chunk times its weight chunk, multiplied
        # in the activation dtype (bf16 stays on the bf16 VPU), accumulated f32.
        xc = x_ref[:, c * 128:(c + 1) * 128]                 # static slice: free view
        wstart = pl.multiple_of(k * tile_h + c * 128, 128)
        wc = w_ref[:, pl.ds(wstart, 128)]                    # (1, 128), broadcasts
        prod = (xc * wc).astype(jnp.float32)
        if mask_width is not None:
            # Ragged hidden edge: garbage x (possibly NaN/Inf) times zero-padded
            # w is NOT safe, so select the product to 0 past column h_total.
            lane = jax.lax.broadcasted_iota(jnp.int32, (1, 128), 1)
            prod = jnp.where(lane < mask_width, prod, 0.0)
        return prod

    def accum_block(nc_full, tail_width, init):
        # Accumulate nc_full full chunks (+ optional masked tail chunk) into
        # acc_ref.  init=True writes the first chunk instead of zero + add.
        wrote = False
        for c in range(nc_full):
            p = chunk_prod(c)
            if init and not wrote:
                acc_ref[...] = p
            else:
                acc_ref[...] += p
            wrote = True
        if tail_width:
            p = chunk_prod(nc_full, mask_width=tail_width)
            if init and not wrote:
                acc_ref[...] = p
            else:
                acc_ref[...] += p

    def finalize():
        # One cross-lane XLU reduce per batch tile, then a lane-dense store
        # with the batch on the lane axis (no masked vst).
        totals = jnp.sum(acc_ref[...], axis=-1) + b_ref[0, 0]     # (TILE_B,)
        o_ref[...] = totals.astype(o_ref.dtype)[None, None, :]

    if nk == 1:
        # Common value-head case: no hidden reduction across grid steps, so no
        # zero / phased finalize -- accumulate and write the output directly.
        accum_block(full_last, rem, init=True)
        finalize()
    else:
        @pl.when(k == 0)
        def _zero():
            acc_ref[...] = jnp.zeros_like(acc_ref)

        if w_last == tile_h:
            # H divides tile_h: every hidden block is full, no masking anywhere.
            accum_block(n_chunks, 0, init=False)
        else:
            @pl.when(k < nk - 1)
            def _full_blocks():
                accum_block(n_chunks, 0, init=False)

            @pl.when(k == nk - 1)
            def _ragged_block():
                accum_block(full_last, rem, init=False)

        @pl.when(k == nk - 1)
        def _finalize():
            finalize()


def value_head_forward(x, weight, bias, *, tile_b=256, tile_h=8192, out_dtype=None):
    """Pallas forward of ValueHead: squeeze(x @ W.T + b, -1).

    x: (..., H); weight: (1, H) or (H,) (torch Linear weight); bias: (1,) or ().
    Returns shape x.shape[:-1].  Output dtype defaults to
    result_type(x.dtype, weight.dtype) (so bf16 activations with f32 params
    return f32, matching the torch module); override with out_dtype.
    """
    x = jnp.asarray(x)
    *lead, H = x.shape
    B = 1
    for d in lead:
        B *= d
    x2 = x.reshape(B, H)

    weight = jnp.asarray(weight).reshape(1, H)
    bias2d = jnp.asarray(bias).reshape(1, 1).astype(jnp.float32)
    if out_dtype is None:
        out_dtype = jnp.result_type(x.dtype, weight.dtype)
    # Multiply in the activation dtype (bf16 multiplies stay on the bf16 VPU on
    # v6e/v7x); accumulation inside the kernel is always f32.
    weight = weight.astype(x.dtype)

    # Tile sizes: multiples of (8, 128), clamped to the problem size.
    tile_b = max(8, min(tile_b, _round_up(B, 8)))
    tile_h = max(128, min(tile_h, _round_up(H, 128)))
    # v7x megacore: keep >= 2 blocks on the "parallel" batch axis when there is
    # enough batch to split, so both TensorCores get work.
    if _round_up(B, 8) >= 16 and pl.cdiv(B, tile_b) < 2:
        tile_b = _round_up(pl.cdiv(B, 2), 8)

    nb = pl.cdiv(B, tile_b)
    nk = pl.cdiv(H, tile_h)
    h_pad = nk * tile_h

    # x is NOT padded (a pad would re-copy all of x through HBM).  The tiny
    # weight row IS zero-padded to the blocked width and kept VMEM-resident
    # (constant index_map -> DMA'd exactly once).
    if h_pad != H:
        weight = jnp.pad(weight, ((0, 0), (0, h_pad - H)))

    kernel = functools.partial(_value_head_kernel, tile_h=tile_h, nk=nk, h_total=H)

    block_bytes = tile_b * tile_h * x.dtype.itemsize
    vmem_limit = int(min(64 << 20, max(32 << 20, 3 * block_bytes + (4 << 20))))

    out = pl.pallas_call(
        kernel,
        out_shape=jax.ShapeDtypeStruct((nb, 1, tile_b), out_dtype),
        grid_spec=pltpu.PrefetchScalarGridSpec(
            num_scalar_prefetch=0,
            grid=(nb, nk),
            in_specs=[
                # NOTE: sweep pipeline_mode=pl.Buffered(3) here on v7x if DMA
                # issue latency shows up exposed; depth-2 default elsewhere.
                pl.BlockSpec((tile_b, tile_h), lambda i, k: (i, k)),
                pl.BlockSpec((1, h_pad), lambda i, k: (0, 0)),      # resident weight
                pl.BlockSpec(memory_space=pltpu.SMEM),              # bias scalar
            ],
            out_specs=pl.BlockSpec((1, 1, tile_b), lambda i, k: (i, 0, 0)),
            scratch_shapes=[pltpu.VMEM((tile_b, 128), jnp.float32)],
        ),
        compiler_params=pltpu.CompilerParams(
            dimension_semantics=("parallel", "arbitrary"),
            vmem_limit_bytes=vmem_limit,
        ),
    )(x2, weight, bias2d)

    # Ragged last batch block: output lanes >= B hold garbage derived from
    # out-of-bounds rows of x; this slice is what makes the unmasked batch
    # edge correct.
    return out.reshape(nb * tile_b)[:B].reshape(tuple(lead))


if __name__ == "__main__":
    key = jax.random.PRNGKey(0)
    k_x, k_w, k_b, k_x2 = jax.random.split(key, 4)

    # --- Check 1: small shapes straight from the module (Linear(hidden, 1)) ---
    batch, hidden = 8, 32
    # torch default init is U(-1/sqrt(H), 1/sqrt(H)); reproduce that range.
    bound = 1.0 / jnp.sqrt(jnp.float32(hidden))
    weight = jax.random.uniform(k_w, (1, hidden), jnp.float32, -bound, bound)
    bias = jax.random.uniform(k_b, (1,), jnp.float32, -bound, bound)
    x = jax.random.normal(k_x, (batch, hidden), jnp.float32)

    out = jax.block_until_ready(value_head_forward(x, weight, bias))
    ref = jnp.sum(x * weight, axis=-1) + bias[0]
    assert out.shape == (batch,)
    assert jnp.allclose(out, ref, atol=1e-5, rtol=1e-5)

    # --- Check 2: ragged batch + ragged hidden with default tiles (nk == 1
    #     fast path, in-kernel hidden mask, batch-edge slice, megacore split) ---
    batch2, hidden2 = 44, 300
    bound2 = 1.0 / jnp.sqrt(jnp.float32(hidden2))
    weight2 = jax.random.uniform(k_w, (1, hidden2), jnp.float32, -bound2, bound2)
    bias2 = jax.random.uniform(k_b, (1,), jnp.float32, -bound2, bound2)
    x2 = jax.random.normal(k_x2, (batch2, hidden2), jnp.float32)
    ref2 = jnp.sum(x2 * weight2, axis=-1) + bias2[0]

    out2 = jax.block_until_ready(value_head_forward(x2, weight2, bias2))
    assert out2.shape == (batch2,)
    assert jnp.allclose(out2, ref2, atol=1e-4, rtol=1e-4)

    # --- Check 3: force the multi-step hidden reduction path (nk > 1) with
    #     ragged last blocks on both axes ---
    out3 = jax.block_until_ready(
        value_head_forward(x2, weight2, bias2, tile_b=16, tile_h=128))
    assert out3.shape == (batch2,)
    assert jnp.allclose(out3, ref2, atol=1e-4, rtol=1e-4)

    # TODO(synk): `fn` (arbitrary init callable) and `return_normalizer` are
    # optional Python hooks in the torch module (None by default); not
    # representable as a fixed kernel.
    print("KERNEL_OK")
</pallas_src>

<mosaic_0001>
module attributes {stable_mosaic.version = 11 : i64} {
  func.func @_value_head_kernel(%arg0: i32, %arg1: i32, %arg2: memref<8x128xf32, #tpu.memory_space<vmem>>, %arg3: memref<1x128xf32, #tpu.memory_space<vmem>>, %arg4: memref<1x1xf32, #tpu.memory_space<smem>>, %arg5: memref<1x1x8xf32, #tpu.memory_space<vmem>>, %arg6: memref<8x128xf32, #tpu.memory_space<vmem>>) attributes {dimension_semantics = [#tpu.dimension_semantics<parallel>, #tpu.dimension_semantics<arbitrary>], iteration_bounds = array<i64: 1, 1>, scalar_prefetch = 0 : i64, scratch_operands = 1 : i64, tpu.core_type = #tpu.core_type<tc>, window_params = [{transform_indices = @transform_0, window_bounds = array<i64: 8, 128>}, {pipeline_mode = #tpu.pipeline_mode<synchronous>, transform_indices = @transform_1, window_bounds = array<i64: 1, 128>}, {transform_indices = @transform_2, window_bounds = array<i64: 1, 1>}, {transform_indices = @transform_3, window_bounds = array<i64: 1, 1, 8>}]} {
    %c0 = arith.constant 0 : index
    %c0_0 = arith.constant 0 : index
    %0 = vector.load %arg2[%c0, %c0_0] : memref<8x128xf32, #tpu.memory_space<vmem>>, vector<8x128xf32>
    %c128_i32 = arith.constant 128 : i32
    %1 = arith.muli %arg1, %c128_i32 : i32
    %c0_i32 = arith.constant 0 : i32
    %2 = arith.addi %1, %c0_i32 : i32
    %3 = tpu.assume_multiple %2, 128 : i32
    %c0_1 = arith.constant 0 : index
    %4 = arith.index_cast %3 : i32 to index
    %5 = vector.load %arg3[%c0_1, %4] : memref<1x128xf32, #tpu.memory_space<vmem>>, vector<1x128xf32>
    %6 = vector.broadcast %5 : vector<1x128xf32> to vector<8x128xf32>
    %7 = arith.mulf %0, %6 : vector<8x128xf32>
    %8 = tpu.iota {dimensions = array<i32: 1>} : vector<1x128xi32>
    %c32_i32 = arith.constant 32 : i32
    %9 = vector.broadcast %c32_i32 : i32 to vector<1x128xi32>
    %10 = arith.cmpi slt, %8, %9 : vector<1x128xi32>
    %cst = arith.constant 0.000000e+00 : f32
    %11 = vector.shape_cast %10 : vector<1x128xi1> to vector<1x128xi1>
    %12 = vector.broadcast %11 : vector<1x128xi1> to vector<8x128xi1>
    %13 = vector.broadcast %cst : f32 to vector<8x128xf32>
    %14 = arith.select %12, %7, %13 : vector<8x128xi1>, vector<8x128xf32>
    %c0_2 = arith.constant 0 : index
    %c0_3 = arith.constant 0 : index
    %15 = vector.load %arg6[%c0_2, %c0_3] : memref<8x128xf32, #tpu.memory_space<vmem>>, vector<8x128xf32>
    tpu.vector_store %arg6[%c0_2, %c0_3], %14 {strides = array<i32>} : memref<8x128xf32, #tpu.memory_space<vmem>>, vector<8x128xf32>,
    %c0_4 = arith.constant 0 : index
    %c0_5 = arith.constant 0 : index
    %16 = vector.load %arg6[%c0_4, %c0_5] : memref<8x128xf32, #tpu.memory_space<vmem>>, vector<8x128xf32>
    %cst_6 = arith.constant dense<0.000000e+00> : vector<8xf32>
    %17 = vector.multi_reduction <add>, %16, %cst_6 [1] : vector<8x128xf32> to vector<8xf32>
    %c0_7 = arith.constant 0 : index
    %c0_8 = arith.constant 0 : index
    %18 = memref.load %arg4[%c0_7, %c0_8] : memref<1x1xf32, #tpu.memory_space<smem>>
    %19 = vector.broadcast %18 : f32 to vector<8xf32>
    %20 = arith.addf %17, %19 : vector<8xf32>
    %21 = vector.shape_cast %20 : vector<8xf32> to vector<1x1x8xf32>
    %c0_9 = arith.constant 0 : index
    %c0_10 = arith.constant 0 : index
    %c0_11 = arith.constant 0 : index
    %22 = vector.load %arg5[%c0_9, %c0_10, %c0_11] : memref<1x1x8xf32, #tpu.memory_space<vmem>>, vector<1x1x8xf32>
    tpu.vector_store %arg5[%c0_9, %c0_10, %c0_11], %21 {strides = array<i32>} : memref<1x1x8xf32, #tpu.memory_space<vmem>>, vector<1x1x8xf32>,
    return
  }
  func.func @transform_0(%arg0: i32, %arg1: i32) -> (i32, i32) {
    %c0_i32 = arith.constant 0 : i32
    return %arg0, %arg1 : i32, i32
  }
  func.func @transform_1(%arg0: i32, %arg1: i32) -> (i32, i32) {
    %c0_i32 = arith.constant 0 : i32
    %c0_i32_0 = arith.constant 0 : i32
    %c0_i32_1 = arith.constant 0 : i32
    return %c0_i32, %c0_i32_0 : i32, i32
  }
  func.func @transform_2(%arg0: i32, %arg1: i32) -> (i32, i32) {
    %c0_i32 = arith.constant 0 : i32
    %c0_i32_0 = arith.constant 0 : i32
    %c0_i32_1 = arith.constant 0 : i32
    return %c0_i32, %c0_i32_0 : i32, i32
  }
  func.func @transform_3(%arg0: i32, %arg1: i32) -> (i32, i32, i32) {
    %c0_i32 = arith.constant 0 : i32
    %c0_i32_0 = arith.constant 0 : i32
    %c0_i32_1 = arith.constant 0 : i32
    return %arg0, %c0_i32, %c0_i32_0 : i32, i32, i32
  }
}

</mosaic_0001>

<llo_original>
// kernel: tpu_custom_call.1
$region0: #{tpu_custom_call.1}
  #allocation0 [shape = 'u32[]', space=smem, size = 0x4, offset = 0x4, fixed_abs, tag = 'smem constant byte address 0x4 - core index']
  #allocation1 [shape = 'u32[144,128]{1,0:T(1,128)}', space=vmem, size = 0x12000, scoped, tag = 'internal scratch']
  #allocation2 [shape = 'f32[8,128]{1,0:T(8,128)}', space=vmem, size = 0x1000, scoped, tag = 'scratch operand']
  #allocation3 [shape = 'f32[1,1]{1,0:T(1,128)S(6)}', space=smem, size = 0x200, scoped, tag = 'scoped memory for tpu_custom_call.1']
  %s0 = inlined_call_operand.hbm [shape: f32[8,32], index: 0, kind: input, shape index: {}]
  %s1 = inlined_call_operand.vmem [shape: f32[1,128], index: 1, kind: input, shape index: {}]
  %s2 = inlined_call_operand.<no memory space> [shape: f32[1,1], index: 2, kind: input, shape index: {}]
  %s3 = inlined_call_operand.hbm [shape: f32[1,1,8], index: 3, kind: output, shape index: {}]
  %s4 = sld [smem:[#allocation0]]
  $region26: #{tpu_custom_call.1} parent=0
    _
  %s6 = ssub.s32 1, %s4
  %s7 = scalar_select 0, %s6, %s4
  %8 = sst [smem:[#allocation3]] %s2
  $region1: #{tpu_custom_call.1} parent=0
    #allocation4 [shape = 'u8[4096]{0}', space=vmem, size = 0x1000, scoped, tag = 'input window, operand 0, single buffered']
    #allocation5 [shape = 's32[1]{0}', space=sflag, size = 0x4, scoped, tag = 'scoped memory for tpu_custom_call.1']
    #allocation6 [shape = 's32[1]{0}', space=sflag, size = 0x4, scoped, tag = 'scoped memory for tpu_custom_call.1']
    #allocation7 [shape = 'u8[512]{0}', space=vmem, size = 0x400, scoped, tag = 'output window, operand 0, single buffered']
    %9 = vsyncpa [#allocation5], 0
    %10 = vsyncpa [#allocation6], 0
    // Predicated region
    $region2: #{tpu_custom_call.1} parent=1 // pred_check
      _
    $region3: #{tpu_custom_call.1} parent=1 // pred_check_branch
      %12 = sbr.rel (0) target = $region5
    $region4: #{tpu_custom_call.1} parent=1 // pred_region
      %s14 = ssub.s32 128, 128
      %15 = vsyncadd [#allocation5], %s14
      %s17 = sshll.u32 [#allocation4], 4
      %s18 = int_to_ptr.vmem [resolvable:$true] %s17
      %20 = dma.hbm_to_vmem [thread:$0]  %s0, 128, %s18, [#allocation5]
    $region5: #{tpu_custom_call.1} parent=1 // pred_fallthru
      _
    // Predicated region
    $region6: #{tpu_custom_call.1} parent=1 // pred_check
      _
    $region7: #{tpu_custom_call.1} parent=1 // pred_check_branch
      %22 = sbr.rel (0) target = $region9
    $region8: #{tpu_custom_call.1} parent=1 // pred_region
      _
    $region9: #{tpu_custom_call.1} parent=1 // pred_fallthru
      _
    // Predicated region
    $region10: #{tpu_custom_call.1} parent=1 // pred_check
      _
    $region11: #{tpu_custom_call.1} parent=1 // pred_check_branch
      %24 = sbr.rel (0) target = $region13
    $region12: #{tpu_custom_call.1} parent=1 // pred_region
      _
    $region13: #{tpu_custom_call.1} parent=1 // pred_fallthru
      _
    // Predicated region
    $region14: #{tpu_custom_call.1} parent=1 // pred_check
      _
    $region15: #{tpu_custom_call.1} parent=1 // pred_check_branch
      %26 = sbr.rel (0) target = $region17
    $region16: #{tpu_custom_call.1} parent=1 // pred_region
      %27 = dma.done [#allocation5], 128
    $region17: #{tpu_custom_call.1} parent=1 // pred_fallthru
      _
    %v28 = vld [vmem:[#allocation4] sm:$0xff]
    %s29 = smul.u32 0, 128
    %s30 = sshra.s32 %s29, 7
    %s31 = sand.u32 %s29, 127
    %s32 = scalar_lea.vmem %s1, %s30
    %v33 = vld [vmem:[%s32] sm:$0x1]
    %v35 = vlaneseq
    %v36 = vshrl.u32 %v35, 7
    %v37 = vsub.s32 0, %v36
    %v38 = vrot.slane %v33, %v37
    %v40 = vmul.f32 %v28, %v38
    %v41 = vlaneseq
    %v42 = vand.u32 %v41, 127
    %vm43 = vcmp.lt.s32.totalorder %v42, 32
    %v44 = vsel %vm43, 1, 0
    %vm45 = vcmp.eq.s32.totalorder %v44, 1
    %v46 = vsel %vm45, %v40, 0.0
    %47 = vst [vmem:[#allocation2] sm:$0xff] %v46
    %v48 = vld [vmem:[#allocation2] sm:$0xff]
    %49 = vadd.xlane.f32.xlu0 %v48
    %v50 = vpop.xlane.xlu0 %49
    %s51 = sld [smem:[#allocation3]]
    %v52 = vstv %s51
    %v53 = vadd.f32 %v50, %v52
    %v55 = vlaneseq
    %v56 = vshrl.u32 %v55, 7
    %v57 = vsub.s32 %v42, %v56
    %v58 = vrot.slane %v53, %v57
    %vm60 = vcmask 57344
    %61 = vst.msk [vmem:[#allocation7] sm:$0x1] %vm60, %v58
    // Predicated region
    $region18: #{tpu_custom_call.1} parent=1 // pred_check
      _
    $region19: #{tpu_custom_call.1} parent=1 // pred_check_branch
      %63 = sbr.rel (0) target = $region21
    $region20: #{tpu_custom_call.1} parent=1 // pred_region
      %s65 = ssub.s32 16, 16
      %66 = vsyncadd [#allocation6], %s65
      %s68 = sshll.u32 [#allocation7], 4
      %s69 = int_to_ptr.vmem [resolvable:$true] %s68
      %71 = dma.vmem_to_hbm [thread:$0]  %s69, 16, %s3, [#allocation6]
    $region21: #{tpu_custom_call.1} parent=1 // pred_fallthru
      _
    // Predicated region
    $region22: #{tpu_custom_call.1} parent=1 // pred_check
      _
    $region23: #{tpu_custom_call.1} parent=1 // pred_check_branch
      %73 = sbr.rel (0) target = $region25
    $region24: #{tpu_custom_call.1} parent=1 // pred_region
      %74 = dma.done [#allocation6], 16
    $region25: #{tpu_custom_call.1} parent=1 // pred_fallthru
      _
    %75 = vsyncpa [#allocation5], 1
    %76 = vsyncpa [#allocation6], 1

</llo_original>
